<compile_context>
chip_gen: v7x
topology: tpu7x:2x2x1
jax: 0.10.0
libtpu: 0.0.40
codegen_flags: <defaults>
</compile_context>

<pallas_src>
import functools

import jax
import jax.numpy as jnp
from jax import lax
from jax.experimental import pallas as pl
from jax.experimental.pallas import tpu as pltpu


# ----------------------------------------------------------------------------------
# Kernel 1: fused Q/K/V projection.  q/k/v = x @ W.T for a (tm, D) row tile.
# Weights use constant-index BlockSpecs -> one DMA for the whole grid.
# ----------------------------------------------------------------------------------
def _qkv_proj_kernel(x_ref, wq_ref, wk_ref, wv_ref, q_ref, k_ref, v_ref):
    x = x_ref[...]                                  # (tm, D), already in matmul dtype
    contract_last = (((1,), (1,)), ((), ()))        # x @ W.T (W is torch (out, in) layout)
    q_ref[...] = lax.dot_general(x, wq_ref[...], contract_last,
                                 preferred_element_type=jnp.float32).astype(q_ref.dtype)
    k_ref[...] = lax.dot_general(x, wk_ref[...], contract_last,
                                 preferred_element_type=jnp.float32).astype(k_ref.dtype)
    v_ref[...] = lax.dot_general(x, wv_ref[...], contract_last,
                                 preferred_element_type=jnp.float32).astype(v_ref.dtype)


# ----------------------------------------------------------------------------------
# Kernel 2: scores + softmax + P@V + output projection, fused.
# Block views (batch dim squeezed):
#   q_ref   : (hb, tq, d_k)    query slab for the hb heads of this head group
#   k_ref   : (H,  S,  d_k)    all-head K, resident across qi / head-group steps
#   v_ref   : (H,  S,  d_k)    all-head V, resident
#   wot_ref : (H,  d_k, D)     Wo.T head-major, resident for the whole call
#   out_ref : (tq, D) f32      accumulated over the head-group ("arbitrary") grid axis
#   qk_ref  : (hb, tq, S)      optional pre-softmax scores (lane-dense last dim = S)
# ----------------------------------------------------------------------------------
def _attn_kernel(q_ref, k_ref, v_ref, wot_ref, out_ref, *maybe_qk_ref,
                 hb, approx_softmax):
    qk_ref = maybe_qk_ref[0] if maybe_qk_ref else None
    hg = pl.program_id(2)

    @pl.when(hg == 0)
    def _init():
        out_ref[...] = jnp.zeros_like(out_ref)

    c_nt = (((1,), (1,)), ((), ()))   # a @ b.T (contract last dims)
    c_nn = (((1,), (0,)), ((), ()))   # a @ b

    for j in range(hb):               # static, unrolled over the heads in this group
        h = hg * hb + j               # global head index (dynamic leading-axis index)
        q = q_ref[j]                  # (tq, d_k)  -- d_k**-0.5 scale already folded into Wq
        k = k_ref[h]                  # (S,  d_k)
        v = v_ref[h]                  # (S,  d_k)

        # Scaled scores; matches torch's (q*s) @ (k*s).T with s = d_k**-0.25.
        s = lax.dot_general(q, k, c_nt, preferred_element_type=jnp.float32)   # (tq, S)
        if qk_ref is not None:
            qk_ref[j] = s.astype(qk_ref.dtype)

        # Softmax over keys, f32 math.
        m = jnp.max(s, axis=-1, keepdims=True)
        e = jnp.exp(s - m)
        denom = jnp.sum(e, axis=-1, keepdims=True)
        if approx_softmax:
            p = e * pl.reciprocal(denom, approx=True)   # EUP slot (perf path only)
        else:
            p = e / denom                               # exact (f32 parity path)

        # Head output fused into the output projection:
        #   out += (p @ v_h) @ Wo.T[h]
        hv = lax.dot_general(p.astype(v.dtype), v, c_nn,
                             preferred_element_type=jnp.float32)              # (tq, d_k)
        wo_h = wot_ref[h]                                                     # (d_k, D)
        out_ref[...] += lax.dot_general(hv.astype(wo_h.dtype), wo_h, c_nn,
                                        preferred_element_type=jnp.float32)   # (tq, D)


# ----------------------------------------------------------------------------------
# Wrapper
# ----------------------------------------------------------------------------------
def _largest_tile(extent, cap):
    """Largest multiple of 8 that divides `extent` and is <= cap; else the full extent."""
    cands = [t for t in range(8, min(cap, extent) + 1, 8) if extent % t == 0]
    return max(cands) if cands else extent


def _pick_heads_per_block(n_head, d_k):
    """Aim for ~256 lanes of head width per grid step (MXU-friendly), dividing n_head."""
    hb = max(1, min(n_head, 256 // max(d_k, 1)))
    while n_head % hb:
        hb -= 1
    return max(hb, 1)


def multi_head_attention(x, wq, wk, wv, wo, *, n_head,
                         block_q=256, block_rows=512, heads_per_block=None,
                         use_bf16_matmul=True, return_qk=True, qk_dtype=jnp.float32,
                         vmem_limit_bytes=None):
    """x: (B, S, D) f32; wq/wk/wv/wo: (D, D) PyTorch Linear weights (out_features, in_features).

    Returns (out (B,S,D) f32, qk (B,H,S,S) qk_dtype or None), matching the module's
    non-SDPA forward (qk is the pre-softmax scores; None when return_qk=False).
    """
    B, S, D = x.shape
    assert D % n_head == 0, "d_model is not divisible by n_head"
    d_k = D // n_head

    mm_dtype = jnp.bfloat16 if use_bf16_matmul else x.dtype
    hb = heads_per_block or _pick_heads_per_block(n_head, d_k)
    assert n_head % hb == 0, "heads_per_block must divide n_head"
    n_hg = n_head // hb

    # Query-tile size: largest 8-multiple divisor of S <= block_q.  For B == 1, halve it
    # (when legal) so the v7x megacore gets >= 2 parallel tiles.
    tq = _largest_tile(S, block_q)
    if B == 1 and tq == S and S >= 16 and (S // 2) % 8 == 0:
        tq = S // 2
    assert S % tq == 0
    n_q = S // tq

    # ---- weight / input prep (done once, outside the grid) --------------------------
    scale = float(d_k) ** -0.5
    x2 = x.reshape(B * S, D).astype(mm_dtype)
    wq_mm = (wq * scale).astype(mm_dtype)     # fold the softmax scale into Wq once
    wk_mm = wk.astype(mm_dtype)
    wv_mm = wv.astype(mm_dtype)
    wot_mm = wo.T.reshape(n_head, d_k, D).astype(mm_dtype)   # head-major rows of Wo.T

    # ---- kernel 1: fused Q/K/V projection --------------------------------------------
    BS = B * S
    tm = _largest_tile(BS, block_rows)
    row_tile = pl.BlockSpec((tm, D), lambda i: (i, 0))
    full_w = pl.BlockSpec((D, D), lambda i: (0, 0))           # resident for the whole grid
    q2, k2, v2 = pl.pallas_call(
        _qkv_proj_kernel,
        out_shape=tuple(jax.ShapeDtypeStruct((BS, D), mm_dtype) for _ in range(3)),
        grid_spec=pltpu.PrefetchScalarGridSpec(
            num_scalar_prefetch=0,
            grid=(BS // tm,),
            in_specs=[row_tile, full_w, full_w, full_w],
            out_specs=[row_tile, row_tile, row_tile],
        ),
        compiler_params=pltpu.CompilerParams(
            dimension_semantics=("parallel",),
            vmem_limit_bytes=vmem_limit_bytes),
    )(x2, wq_mm, wk_mm, wv_mm)

    # Head-major layout (B, H, S, d_k): per-head slabs become leading-axis slices inside
    # the attention kernel (plain XLA transpose, done once; layout plumbing only).
    def to_heads(t):
        return t.reshape(B, S, n_head, d_k).transpose(0, 2, 1, 3)
    qh, kh, vh = to_heads(q2), to_heads(k2), to_heads(v2)

    # ---- kernel 2: attention + fused output projection --------------------------------
    kernel = functools.partial(_attn_kernel, hb=hb, approx_softmax=use_bf16_matmul)

    q_spec = pl.BlockSpec((None, hb, tq, d_k), lambda b, qi, hg: (b, hg, qi, 0))
    kv_spec = pl.BlockSpec((None, n_head, S, d_k), lambda b, qi, hg: (b, 0, 0, 0))
    wot_spec = pl.BlockSpec((n_head, d_k, D), lambda b, qi, hg: (0, 0, 0))

    out_specs = [pl.BlockSpec((None, tq, D), lambda b, qi, hg: (b, qi, 0))]
    out_shapes = [jax.ShapeDtypeStruct((B, S, D), jnp.float32)]
    if return_qk:
        out_specs.append(pl.BlockSpec((None, hb, tq, S), lambda b, qi, hg: (b, hg, qi, 0)))
        out_shapes.append(jax.ShapeDtypeStruct((B, n_head, S, S), qk_dtype))

    results = pl.pallas_call(
        kernel,
        out_shape=tuple(out_shapes),
        grid_spec=pltpu.PrefetchScalarGridSpec(
            num_scalar_prefetch=0,
            grid=(B, n_q, n_hg),
            in_specs=[q_spec, kv_spec, kv_spec, wot_spec],
            out_specs=out_specs,
        ),
        compiler_params=pltpu.CompilerParams(
            dimension_semantics=("parallel", "parallel", "arbitrary"),
            vmem_limit_bytes=vmem_limit_bytes),
    )(qh, kh, vh, wot_mm)

    if return_qk:
        out, qk = results
    else:
        (out,) = results
        qk = None
    return out, qk


# ----------------------------------------------------------------------------------
# Plain-JAX replica of the PyTorch forward (non-SDPA branch) for sanity checking.
# ----------------------------------------------------------------------------------
def _reference(x, wq, wk, wv, wo, n_head):
    B, S, D = x.shape
    d_k = D // n_head
    scale = d_k ** (-0.25)
    q = x @ wq.T
    k = x @ wk.T
    v = x @ wv.T
    q = q.reshape(B, S, n_head, d_k).transpose(0, 2, 1, 3)
    k = k.reshape(B, S, n_head, d_k).transpose(0, 2, 1, 3)
    v = v.reshape(B, S, n_head, d_k).transpose(0, 2, 1, 3)
    qk = jnp.einsum("bhqd,bhkd->bhqk", q * scale, k * scale)
    w = jax.nn.softmax(qk, axis=-1)
    out = jnp.einsum("bhqk,bhkd->bhqd", w, v).transpose(0, 2, 1, 3).reshape(B, S, D)
    out = out @ wo.T
    return out, qk


if __name__ == "__main__":
    B, S, D, H = 2, 64, 64, 4   # batch, seq, d_model, n_head (d_k = 16)

    key = jax.random.PRNGKey(0)
    kx, k1, k2, k3, k4 = jax.random.split(key, 5)
    x = jax.random.normal(kx, (B, S, D), dtype=jnp.float32)
    init_scale = 1.0 / (D ** 0.5)
    wq = jax.random.normal(k1, (D, D), dtype=jnp.float32) * init_scale
    wk = jax.random.normal(k2, (D, D), dtype=jnp.float32) * init_scale
    wv = jax.random.normal(k3, (D, D), dtype=jnp.float32) * init_scale
    wo = jax.random.normal(k4, (D, D), dtype=jnp.float32) * init_scale

    ref_out, ref_qk = _reference(x, wq, wk, wv, wo, H)

    # 1) f32 parity (exact softmax division).  Tolerance covers default MXU precision
    #    for f32 operands on TPU.
    out32, qk32 = multi_head_attention(x, wq, wk, wv, wo, n_head=H,
                                       use_bf16_matmul=False)
    out32, qk32 = jax.block_until_ready((out32, qk32))
    assert jnp.allclose(qk32, ref_qk, atol=2e-2, rtol=2e-2)
    assert jnp.allclose(out32, ref_out, atol=2e-2, rtol=2e-2)

    # 2) f32 again with several query tiles and per-head grid steps (exercises the
    #    head-group accumulation and qk tiling paths).
    out32b, qk32b = multi_head_attention(x, wq, wk, wv, wo, n_head=H,
                                         use_bf16_matmul=False,
                                         block_q=16, heads_per_block=1)
    out32b, qk32b = jax.block_until_ready((out32b, qk32b))
    assert jnp.allclose(qk32b, ref_qk, atol=2e-2, rtol=2e-2)
    assert jnp.allclose(out32b, ref_out, atol=2e-2, rtol=2e-2)

    # 3) Performance configuration: bf16 MXU operands, f32 softmax/accumulation,
    #    qk emitted in bf16 (documented precision difference vs torch's f32 qk).
    out_bf, qk_bf = multi_head_attention(x, wq, wk, wv, wo, n_head=H,
                                         use_bf16_matmul=True,
                                         qk_dtype=jnp.bfloat16)
    out_bf, qk_bf = jax.block_until_ready((out_bf, qk_bf))
    assert jnp.allclose(qk_bf.astype(jnp.float32), ref_qk, atol=1e-1, rtol=1e-1)
    assert jnp.allclose(out_bf, ref_out, atol=1e-1, rtol=1e-1)

    # 4) qk fully disabled (the big-HBM-write lever from the review).
    out_nq, qk_none = multi_head_attention(x, wq, wk, wv, wo, n_head=H,
                                           use_bf16_matmul=True, return_qk=False)
    out_nq = jax.block_until_ready(out_nq)
    assert qk_none is None
    assert jnp.allclose(out_nq, ref_out, atol=1e-1, rtol=1e-1)

    print("KERNEL_OK")
</pallas_src>

<mosaic_0001>
module attributes {stable_mosaic.version = 11 : i64} {
  func.func @_qkv_proj_kernel(%arg0: i32, %arg1: memref<128x64xf32, #tpu.memory_space<vmem>>, %arg2: memref<64x64xf32, #tpu.memory_space<vmem>>, %arg3: memref<64x64xf32, #tpu.memory_space<vmem>>, %arg4: memref<64x64xf32, #tpu.memory_space<vmem>>, %arg5: memref<128x64xf32, #tpu.memory_space<vmem>>, %arg6: memref<128x64xf32, #tpu.memory_space<vmem>>, %arg7: memref<128x64xf32, #tpu.memory_space<vmem>>) attributes {dimension_semantics = [#tpu.dimension_semantics<parallel>], iteration_bounds = array<i64: 1>, scalar_prefetch = 0 : i64, scratch_operands = 0 : i64, tpu.core_type = #tpu.core_type<tc>, window_params = [{transform_indices = @transform_0, window_bounds = array<i64: 128, 64>}, {pipeline_mode = #tpu.pipeline_mode<synchronous>, transform_indices = @transform_1, window_bounds = array<i64: 64, 64>}, {pipeline_mode = #tpu.pipeline_mode<synchronous>, transform_indices = @transform_2, window_bounds = array<i64: 64, 64>}, {pipeline_mode = #tpu.pipeline_mode<synchronous>, transform_indices = @transform_3, window_bounds = array<i64: 64, 64>}, {transform_indices = @transform_4, window_bounds = array<i64: 128, 64>}, {transform_indices = @transform_5, window_bounds = array<i64: 128, 64>}, {transform_indices = @transform_6, window_bounds = array<i64: 128, 64>}]} {
    %c0 = arith.constant 0 : index
    %c0_0 = arith.constant 0 : index
    %0 = vector.load %arg1[%c0, %c0_0] : memref<128x64xf32, #tpu.memory_space<vmem>>, vector<128x64xf32>
    %c0_1 = arith.constant 0 : index
    %c0_2 = arith.constant 0 : index
    %1 = vector.load %arg2[%c0_1, %c0_2] : memref<64x64xf32, #tpu.memory_space<vmem>>, vector<64x64xf32>
    %cst = arith.constant dense<0.000000e+00> : vector<128x64xf32>
    %2 = tpu.matmul %0, %1, %cst {dimension_numbers = #tpu.dot_dimension_numbers<[1], [1], [0], [0], [0, 0, 1, 0], [], []>} : vector<128x64xf32>, vector<64x64xf32>, vector<128x64xf32> -> vector<128x64xf32>
    %c0_3 = arith.constant 0 : index
    %c0_4 = arith.constant 0 : index
    %3 = vector.load %arg5[%c0_3, %c0_4] : memref<128x64xf32, #tpu.memory_space<vmem>>, vector<128x64xf32>
    tpu.vector_store %arg5[%c0_3, %c0_4], %2 {strides = array<i32>} : memref<128x64xf32, #tpu.memory_space<vmem>>, vector<128x64xf32>,
    %c0_5 = arith.constant 0 : index
    %c0_6 = arith.constant 0 : index
    %4 = vector.load %arg3[%c0_5, %c0_6] : memref<64x64xf32, #tpu.memory_space<vmem>>, vector<64x64xf32>
    %cst_7 = arith.constant dense<0.000000e+00> : vector<128x64xf32>
    %5 = tpu.matmul %0, %4, %cst_7 {dimension_numbers = #tpu.dot_dimension_numbers<[1], [1], [0], [0], [0, 0, 1, 0], [], []>} : vector<128x64xf32>, vector<64x64xf32>, vector<128x64xf32> -> vector<128x64xf32>
    %c0_8 = arith.constant 0 : index
    %c0_9 = arith.constant 0 : index
    %6 = vector.load %arg6[%c0_8, %c0_9] : memref<128x64xf32, #tpu.memory_space<vmem>>, vector<128x64xf32>
    tpu.vector_store %arg6[%c0_8, %c0_9], %5 {strides = array<i32>} : memref<128x64xf32, #tpu.memory_space<vmem>>, vector<128x64xf32>,
    %c0_10 = arith.constant 0 : index
    %c0_11 = arith.constant 0 : index
    %7 = vector.load %arg4[%c0_10, %c0_11] : memref<64x64xf32, #tpu.memory_space<vmem>>, vector<64x64xf32>
    %cst_12 = arith.constant dense<0.000000e+00> : vector<128x64xf32>
    %8 = tpu.matmul %0, %7, %cst_12 {dimension_numbers = #tpu.dot_dimension_numbers<[1], [1], [0], [0], [0, 0, 1, 0], [], []>} : vector<128x64xf32>, vector<64x64xf32>, vector<128x64xf32> -> vector<128x64xf32>
    %c0_13 = arith.constant 0 : index
    %c0_14 = arith.constant 0 : index
    %9 = vector.load %arg7[%c0_13, %c0_14] : memref<128x64xf32, #tpu.memory_space<vmem>>, vector<128x64xf32>
    tpu.vector_store %arg7[%c0_13, %c0_14], %8 {strides = array<i32>} : memref<128x64xf32, #tpu.memory_space<vmem>>, vector<128x64xf32>,
    return
  }
  func.func @transform_0(%arg0: i32) -> (i32, i32) {
    %c0_i32 = arith.constant 0 : i32
    %c0_i32_0 = arith.constant 0 : i32
    return %arg0, %c0_i32 : i32, i32
  }
  func.func @transform_1(%arg0: i32) -> (i32, i32) {
    %c0_i32 = arith.constant 0 : i32
    %c0_i32_0 = arith.constant 0 : i32
    %c0_i32_1 = arith.constant 0 : i32
    return %c0_i32, %c0_i32_0 : i32, i32
  }
  func.func @transform_2(%arg0: i32) -> (i32, i32) {
    %c0_i32 = arith.constant 0 : i32
    %c0_i32_0 = arith.constant 0 : i32
    %c0_i32_1 = arith.constant 0 : i32
    return %c0_i32, %c0_i32_0 : i32, i32
  }
  func.func @transform_3(%arg0: i32) -> (i32, i32) {
    %c0_i32 = arith.constant 0 : i32
    %c0_i32_0 = arith.constant 0 : i32
    %c0_i32_1 = arith.constant 0 : i32
    return %c0_i32, %c0_i32_0 : i32, i32
  }
  func.func @transform_4(%arg0: i32) -> (i32, i32) {
    %c0_i32 = arith.constant 0 : i32
    %c0_i32_0 = arith.constant 0 : i32
    return %arg0, %c0_i32 : i32, i32
  }
  func.func @transform_5(%arg0: i32) -> (i32, i32) {
    %c0_i32 = arith.constant 0 : i32
    %c0_i32_0 = arith.constant 0 : i32
    return %arg0, %c0_i32 : i32, i32
  }
  func.func @transform_6(%arg0: i32) -> (i32, i32) {
    %c0_i32 = arith.constant 0 : i32
    %c0_i32_0 = arith.constant 0 : i32
    return %arg0, %c0_i32 : i32, i32
  }
}

</mosaic_0001>

<llo_original>
// kernel: tpu_custom_call.1
$region0: #{tpu_custom_call.1}
  #allocation0 [shape = 'u32[]', space=smem, size = 0x4, offset = 0x4, fixed_abs, tag = 'smem constant byte address 0x4 - core index']
  #allocation1 [shape = 'u32[144,128]{1,0:T(1,128)}', space=vmem, size = 0x12000, scoped, tag = 'internal scratch']
  %s0 = inlined_call_operand.vmem [shape: f32[128,64], index: 0, kind: input, shape index: {}]
  %s1 = inlined_call_operand.vmem [shape: f32[64,64], index: 1, kind: input, shape index: {}]
  %s2 = inlined_call_operand.vmem [shape: f32[64,64], index: 2, kind: input, shape index: {}]
  %s3 = inlined_call_operand.vmem [shape: f32[64,64], index: 3, kind: input, shape index: {}]
  %s4 = inlined_call_operand.vmem [shape: f32[128,64], index: 4, kind: output, shape index: {0}]
  %s5 = inlined_call_operand.vmem [shape: f32[128,64], index: 5, kind: output, shape index: {1}]
  %s6 = inlined_call_operand.vmem [shape: f32[128,64], index: 6, kind: output, shape index: {2}]
  %7 = xla_tuple %s4, %s5, %s6
  %s8 = sld [smem:[#allocation0]]
  $region42: #{tpu_custom_call.1} parent=0
    _
  %s10 = ssub.s32 1, %s8
  %s11 = scalar_select 0, %s10, %s8
  // Predicated region
  $region2: #{tpu_custom_call.1} parent=0 // pred_check
    _
  $region3: #{tpu_custom_call.1} parent=0 // pred_check_branch
    %13 = sbr.rel (0) target = $region5
  $region4: #{tpu_custom_call.1} parent=0 // pred_region
    _
  $region5: #{tpu_custom_call.1} parent=0 // pred_fallthru
    _
  // Predicated region
  $region6: #{tpu_custom_call.1} parent=0 // pred_check
    _
  $region7: #{tpu_custom_call.1} parent=0 // pred_check_branch
    %15 = sbr.rel (0) target = $region9
  $region8: #{tpu_custom_call.1} parent=0 // pred_region
    _
  $region9: #{tpu_custom_call.1} parent=0 // pred_fallthru
    _
  // Predicated region
  $region10: #{tpu_custom_call.1} parent=0 // pred_check
    _
  $region11: #{tpu_custom_call.1} parent=0 // pred_check_branch
    %17 = sbr.rel (0) target = $region13
  $region12: #{tpu_custom_call.1} parent=0 // pred_region
    _
  $region13: #{tpu_custom_call.1} parent=0 // pred_fallthru
    _
  // Predicated region
  $region14: #{tpu_custom_call.1} parent=0 // pred_check
    _
  $region15: #{tpu_custom_call.1} parent=0 // pred_check_branch
    %19 = sbr.rel (0) target = $region17
  $region16: #{tpu_custom_call.1} parent=0 // pred_region
    _
  $region17: #{tpu_custom_call.1} parent=0 // pred_fallthru
    _
  %v20 = vld [vmem:[%s0] sm:$0xff]
  %v21 = vld [vmem:[%s0 + $0x8] sm:$0xff]
  %v22 = vld [vmem:[%s0 + $0x10] sm:$0xff]
  %v23 = vld [vmem:[%s0 + $0x18] sm:$0xff]
  %v24 = vld [vmem:[%s0 + $0x20] sm:$0xff]
  %v25 = vld [vmem:[%s0 + $0x28] sm:$0xff]
  %v26 = vld [vmem:[%s0 + $0x30] sm:$0xff]
  %v27 = vld [vmem:[%s0 + $0x38] sm:$0xff]
  %v28 = vld [vmem:[%s0 + $0x40] sm:$0xff]
  %v29 = vld [vmem:[%s0 + $0x48] sm:$0xff]
  %v30 = vld [vmem:[%s0 + $0x50] sm:$0xff]
  %v31 = vld [vmem:[%s0 + $0x58] sm:$0xff]
  %v32 = vld [vmem:[%s0 + $0x60] sm:$0xff]
  %v33 = vld [vmem:[%s0 + $0x68] sm:$0xff]
  %v34 = vld [vmem:[%s0 + $0x70] sm:$0xff]
  %v35 = vld [vmem:[%s0 + $0x78] sm:$0xff]
  %v36 = vld [vmem:[%s1] sm:$0xff]
  %v37 = vld [vmem:[%s1 + $0x8] sm:$0xff]
  %v38 = vld [vmem:[%s1 + $0x10] sm:$0xff]
  %v39 = vld [vmem:[%s1 + $0x18] sm:$0xff]
  %v40 = vld [vmem:[%s1 + $0x20] sm:$0xff]
  %v41 = vld [vmem:[%s1 + $0x28] sm:$0xff]
  %v42 = vld [vmem:[%s1 + $0x30] sm:$0xff]
  %v43 = vld [vmem:[%s1 + $0x38] sm:$0xff]
  %vm44 = vcmask 523264
  %v46 = vsel %vm44, %v20, 0
  %v49 = vsel %vm44, %v21, 0
  %v52 = vsel %vm44, %v22, 0
  %v55 = vsel %vm44, %v23, 0
  %v58 = vsel %vm44, %v24, 0
  %v61 = vsel %vm44, %v25, 0
  %v64 = vsel %vm44, %v26, 0
  %v67 = vsel %vm44, %v27, 0
  %v70 = vsel %vm44, %v28, 0
  %v73 = vsel %vm44, %v29, 0
  %v76 = vsel %vm44, %v30, 0
  %v79 = vsel %vm44, %v31, 0
  %v82 = vsel %vm44, %v32, 0
  %v85 = vsel %vm44, %v33, 0
  %v88 = vsel %vm44, %v34, 0
  %v91 = vsel %vm44, %v35, 0
  %v94 = vsel %vm44, %v36, 0
  %v97 = vsel %vm44, %v37, 0
  %v100 = vsel %vm44, %v38, 0
  %v103 = vsel %vm44, %v39, 0
  %v106 = vsel %vm44, %v40, 0
  %v109 = vsel %vm44, %v41, 0
  %v112 = vsel %vm44, %v42, 0
  %v115 = vsel %vm44, %v43, 0
  %117 = vmatprep.subr.mxu0 0.0
  %118 = vmatpush1.xpose.msra.mxu0 %v94
  %119 = vmatprep.subr.mxu0 0.0
  %120 = vmatpush1.xpose.msra.mxu0 %v97
  %121 = vmatprep.subr.mxu0 0.0
  %122 = vmatpush1.xpose.msra.mxu0 %v100
  %123 = vmatprep.subr.mxu0 0.0
  %124 = vmatpush1.xpose.msra.mxu0 %v103
  %125 = vmatprep.subr.mxu0 0.0
  %126 = vmatpush1.xpose.msra.mxu0 %v106
  %127 = vmatprep.subr.mxu0 0.0
  %128 = vmatpush1.xpose.msra.mxu0 %v109
  %129 = vmatprep.subr.mxu0 0.0
  %130 = vmatpush1.xpose.msra.mxu0 %v112
  %131 = vmatprep.subr.mxu0 0.0
  %132 = vmatpush1.xpose.msra.mxu0 %v115
  %133 = vmatprep.subr.mxu0 0.0
  %134 = vmatpush1.xpose.msra.mxu0 0.0
  %135 = vmatprep.subr.mxu0 0.0
  %136 = vmatpush1.xpose.msra.mxu0 0.0
  %137 = vmatprep.subr.mxu0 0.0
  %138 = vmatpush1.xpose.msra.mxu0 0.0
  %139 = vmatprep.subr.mxu0 0.0
  %140 = vmatpush1.xpose.msra.mxu0 0.0
  %141 = vmatprep.subr.mxu0 0.0
  %142 = vmatpush1.xpose.msra.mxu0 0.0
  %143 = vmatprep.subr.mxu0 0.0
  %144 = vmatpush1.xpose.msra.mxu0 0.0
  %145 = vmatprep.subr.mxu0 0.0
  %146 = vmatpush1.xpose.msra.mxu0 0.0
  %147 = vmatprep.subr.mxu0 0.0
  %148 = vmatpush1.xpose.msra.mxu0 0.0
  %149 = vmatprep.subr.mxu0 0.0
  %150 = vmatpush1.xpose.msra.mxu0 0.0
  %151 = vmatprep.subr.mxu0 0.0
  %152 = vmatpush1.xpose.msra.mxu0 0.0
  %153 = vmatprep.subr.mxu0 0.0
  %154 = vmatpush1.xpose.msra.mxu0 0.0
  %155 = vmatprep.subr.mxu0 0.0
  %156 = vmatpush1.xpose.msra.mxu0 0.0
  %157 = vmatprep.subr.mxu0 0.0
  %158 = vmatpush1.xpose.msra.mxu0 0.0
  %159 = vmatprep.subr.mxu0 0.0
  %160 = vmatpush1.xpose.msra.mxu0 0.0
  %161 = vmatprep.subr.mxu0 0.0
  %162 = vmatpush1.xpose.msra.mxu0 0.0
  %163 = vmatprep.subr.mxu0 0.0
  %164 = vmatpush1.xpose.msra.mxu0 0.0
  %165 = vmatprep.subr.mxu0 0.0
  %166 = vmatpush1.xpose.msra.mxu0 0.0
  %167 = vmatprep.subr.mxu0 0.0
  %168 = vmatpush1.xpose.msra.mxu0 0.0
  %169 = vmatprep.subr.mxu0 0.0
  %170 = vmatpush1.xpose.msra.mxu0 0.0
  %171 = vmatprep.subr.mxu0 0.0
  %172 = vmatpush1.xpose.msra.mxu0 0.0
  %173 = vmatprep.subr.mxu0 0.0
  %174 = vmatpush1.xpose.msra.mxu0 0.0
  %175 = vmatprep.subr.mxu0 0.0
  %176 = vmatpush1.xpose.msra.mxu0 0.0
  %177 = vmatprep.subr.mxu0 0.0
  %178 = vmatpush1.xpose.msra.mxu0 0.0
  %179 = vmatprep.subr.mxu0 0.0
  %180 = vmatpush1.xpose.msra.mxu0 0.0
  %181 = vmatprep.mubr.f32.mxu0 0.0
  %182 = vmatmul.mubr.f32.gmra.mrb[0].mxu0 %v46
  %v183 = vpop.f32.mrb[0].mxu0
  %v184 = vadd.f32 0.0, %v183
  %v185 = vpop.f32.mrb[0].mxu0
  %186 = vmatprep.mubr.f32.mxu0 0.0
  %187 = vmatmul.mubr.f32.gmra.mrb[0].mxu0 %v49
  %v188 = vpop.f32.mrb[0].mxu0
  %v189 = vadd.f32 0.0, %v188
  %v190 = vpop.f32.mrb[0].mxu0
  %191 = vmatprep.mubr.f32.mxu0 0.0
  %192 = vmatmul.mubr.f32.gmra.mrb[0].mxu0 %v52
  %v193 = vpop.f32.mrb[0].mxu0
  %v194 = vadd.f32 0.0, %v193
  %v195 = vpop.f32.mrb[0].mxu0
  %196 = vmatprep.mubr.f32.mxu0 0.0
  %197 = vmatmul.mubr.f32.gmra.mrb[0].mxu0 %v55
  %v198 = vpop.f32.mrb[0].mxu0
  %v199 = vadd.f32 0.0, %v198
  %v200 = vpop.f32.mrb[0].mxu0
  %201 = vmatprep.mubr.f32.mxu0 0.0
  %202 = vmatmul.mubr.f32.gmra.mrb[0].mxu0 %v58
  %v203 = vpop.f32.mrb[0].mxu0
  %v204 = vadd.f32 0.0, %v203
  %v205 = vpop.f32.mrb[0].mxu0
  %206 = vmatprep.mubr.f32.mxu0 0.0
  %207 = vmatmul.mubr.f32.gmra.mrb[0].mxu0 %v61
  %v208 = vpop.f32.mrb[0].mxu0
  %v209 = vadd.f32 0.0, %v208
  %v210 = vpop.f32.mrb[0].mxu0
  %211 = vmatprep.mubr.f32.mxu0 0.0
  %212 = vmatmul.mubr.f32.gmra.mrb[0].mxu0 %v64
  %v213 = vpop.f32.mrb[0].mxu0
  %v214 = vadd.f32 0.0, %v213
  %v215 = vpop.f32.mrb[0].mxu0
  %216 = vmatprep.mubr.f32.mxu0 0.0
  %217 = vmatmul.mubr.f32.gmra.mrb[0].mxu0 %v67
  %v218 = vpop.f32.mrb[0].mxu0
  %v219 = vadd.f32 0.0, %v218
  %v220 = vpop.f32.mrb[0].mxu0
  %221 = vmatprep.mubr.f32.mxu0 0.0
  %222 = vmatmul.mubr.f32.gmra.mrb[0].mxu0 %v70
  %v223 = vpop.f32.mrb[0].mxu0
  %v224 = vadd.f32 0.0, %v223
  %v225 = vpop.f32.mrb[0].mxu0
  %226 = vmatprep.mubr.f32.mxu0 0.0
  %227 = vmatmul.mubr.f32.gmra.mrb[0].mxu0 %v73
  %v228 = vpop.f32.mrb[0].mxu0
  %v229 = vadd.f32 0.0, %v228
  %v230 = vpop.f32.mrb[0].mxu0
  %231 = vmatprep.mubr.f32.mxu0 0.0
  %232 = vmatmul.mubr.f32.gmra.mrb[0].mxu0 %v76
  %v233 = vpop.f32.mrb[0].mxu0
  %v234 = vadd.f32 0.0, %v233
  %v235 = vpop.f32.mrb[0].mxu0
  %236 = vmatprep.mubr.f32.mxu0 0.0
  %237 = vmatmul.mubr.f32.gmra.mrb[0].mxu0 %v79
  %v238 = vpop.f32.mrb[0].mxu0
  %v239 = vadd.f32 0.0, %v238
  %v240 = vpop.f32.mrb[0].mxu0
  %241 = vmatprep.mubr.f32.mxu0 0.0
  %242 = vmatmul.mubr.f32.gmra.mrb[0].mxu0 %v82
  %v243 = vpop.f32.mrb[0].mxu0
  %v244 = vadd.f32 0.0, %v243
  %v245 = vpop.f32.mrb[0].mxu0
  %246 = vmatprep.mubr.f32.mxu0 0.0
  %247 = vmatmul.mubr.f32.gmra.mrb[0].mxu0 %v85
  %v248 = vpop.f32.mrb[0].mxu0
  %v249 = vadd.f32 0.0, %v248
  %v250 = vpop.f32.mrb[0].mxu0
  %251 = vmatprep.mubr.f32.mxu0 0.0
  %252 = vmatmul.mubr.f32.gmra.mrb[0].mxu0 %v88
  %v253 = vpop.f32.mrb[0].mxu0
  %v254 = vadd.f32 0.0, %v253
  %v255 = vpop.f32.mrb[0].mxu0
  %256 = vmatprep.mubr.f32.mxu0 0.0
  %257 = vmatmul.mubr.f32.gmra.mrb[0].mxu0 %v91
  %v258 = vpop.f32.mrb[0].mxu0
  %v259 = vadd.f32 0.0, %v258
  %v260 = vpop.f32.mrb[0].mxu0
  %261 = vdwg.mxu0
  %262 = vst.msk [vmem:[%s4] sm:$0xff] %vm44, %v184
  %263 = vst.msk [vmem:[%s4 + $0x8] sm:$0xff] %vm44, %v189
  %264 = vst.msk [vmem:[%s4 + $0x10] sm:$0xff] %vm44, %v194
  %265 = vst.msk [vmem:[%s4 + $0x18] sm:$0xff] %vm44, %v199
  %266 = vst.msk [vmem:[%s4 + $0x20] sm:$0xff] %vm44, %v204
  %267 = vst.msk [vmem:[%s4 + $0x28] sm:$0xff] %vm44, %v209
  %268 = vst.msk [vmem:[%s4 + $0x30] sm:$0xff] %vm44, %v214
  %269 = vst.msk [vmem:[%s4 + $0x38] sm:$0xff] %vm44, %v219
  %270 = vst.msk [vmem:[%s4 + $0x40] sm:$0xff] %vm44, %v224
  %271 = vst.msk [vmem:[%s4 + $0x48] sm:$0xff] %vm44, %v229
  %272 = vst.msk [vmem:[%s4 + $0x50] sm:$0xff] %vm44, %v234
  %273 = vst.msk [vmem:[%s4 + $0x58] sm:$0xff] %vm44, %v239
  %274 = vst.msk [vmem:[%s4 + $0x60] sm:$0xff] %vm44, %v244
  %275 = vst.msk [vmem:[%s4 + $0x68] sm:$0xff] %vm44, %v249
  %276 = vst.msk [vmem:[%s4 + $0x70] sm:$0xff] %vm44, %v254
  %277 = vst.msk [vmem:[%s4 + $0x78] sm:$0xff] %vm44, %v259
  %v278 = vld [vmem:[%s2] sm:$0xff]
  %v279 = vld [vmem:[%s2 + $0x8] sm:$0xff]
  %v280 = vld [vmem:[%s2 + $0x10] sm:$0xff]
  %v281 = vld [vmem:[%s2 + $0x18] sm:$0xff]
  %v282 = vld [vmem:[%s2 + $0x20] sm:$0xff]
  %v283 = vld [vmem:[%s2 + $0x28] sm:$0xff]
  %v284 = vld [vmem:[%s2 + $0x30] sm:$0xff]
  %v285 = vld [vmem:[%s2 + $0x38] sm:$0xff]
  %v287 = vsel %vm44, %v278, 0
  %v290 = vsel %vm44, %v279, 0
  %v293 = vsel %vm44, %v280, 0
  %v296 = vsel %vm44, %v281, 0
  %v299 = vsel %vm44, %v282, 0
  %v302 = vsel %vm44, %v283, 0
  %v305 = vsel %vm44, %v284, 0
  %v308 = vsel %vm44, %v285, 0
  %310 = vmatprep.subr.mxu0 0.0
  %311 = vmatpush1.xpose.msra.mxu0 %v287
  %312 = vmatprep.subr.mxu0 0.0
  %313 = vmatpush1.xpose.msra.mxu0 %v290
  %314 = vmatprep.subr.mxu0 0.0
  %315 = vmatpush1.xpose.msra.mxu0 %v293
  %316 = vmatprep.subr.mxu0 0.0
  %317 = vmatpush1.xpose.msra.mxu0 %v296
  %318 = vmatprep.subr.mxu0 0.0
  %319 = vmatpush1.xpose.msra.mxu0 %v299
  %320 = vmatprep.subr.mxu0 0.0
  %321 = vmatpush1.xpose.msra.mxu0 %v302
  %322 = vmatprep.subr.mxu0 0.0
  %323 = vmatpush1.xpose.msra.mxu0 %v305
  %324 = vmatprep.subr.mxu0 0.0
  %325 = vmatpush1.xpose.msra.mxu0 %v308
  %326 = vmatprep.subr.mxu0 0.0
  %327 = vmatpush1.xpose.msra.mxu0 0.0
  %328 = vmatprep.subr.mxu0 0.0
  %329 = vmatpush1.xpose.msra.mxu0 0.0
  %330 = vmatprep.subr.mxu0 0.0
  %331 = vmatpush1.xpose.msra.mxu0 0.0
  %332 = vmatprep.subr.mxu0 0.0
  %333 = vmatpush1.xpose.msra.mxu0 0.0
  %334 = vmatprep.subr.mxu0 0.0
  %335 = vmatpush1.xpose.msra.mxu0 0.0
  %336 = vmatprep.subr.mxu0 0.0
  %337 = vmatpush1.xpose.msra.mxu0 0.0
  %338 = vmatprep.subr.mxu0 0.0
  %339 = vmatpush1.xpose.msra.mxu0 0.0
  %340 = vmatprep.subr.mxu0 0.0
  %341 = vmatpush1.xpose.msra.mxu0 0.0
  %342 = vmatprep.subr.mxu0 0.0
  %343 = vmatpush1.xpose.msra.mxu0 0.0
  %344 = vmatprep.subr.mxu0 0.0
  %345 = vmatpush1.xpose.msra.mxu0 0.0
  %346 = vmatprep.subr.mxu0 0.0
  %347 = vmatpush1.xpose.msra.mxu0 0.0
  %348 = vmatprep.subr.mxu0 0.0
  %349 = vmatpush1.xpose.msra.mxu0 0.0
  %350 = vmatprep.subr.mxu0 0.0
  %351 = vmatpush1.xpose.msra.mxu0 0.0
  %352 = vmatprep.subr.mxu0 0.0
  %353 = vmatpush1.xpose.msra.mxu0 0.0
  %354 = vmatprep.subr.mxu0 0.0
  %355 = vmatpush1.xpose.msra.mxu0 0.0
  %356 = vmatprep.subr.mxu0 0.0
  %357 = vmatpush1.xpose.msra.mxu0 0.0
  %358 = vmatprep.subr.mxu0 0.0
  %359 = vmatpush1.xpose.msra.mxu0 0.0
  %360 = vmatprep.subr.mxu0 0.0
  %361 = vmatpush1.xpose.msra.mxu0 0.0
  %362 = vmatprep.subr.mxu0 0.0
  %363 = vmatpush1.xpose.msra.mxu0 0.0
  %364 = vmatprep.subr.mxu0 0.0
  %365 = vmatpush1.xpose.msra.mxu0 0.0
  %366 = vmatprep.subr.mxu0 0.0
  %367 = vmatpush1.xpose.msra.mxu0 0.0
  %368 = vmatprep.subr.mxu0 0.0
  %369 = vmatpush1.xpose.msra.mxu0 0.0
  %370 = vmatprep.subr.mxu0 0.0
  %371 = vmatpush1.xpose.msra.mxu0 0.0
  %372 = vmatprep.subr.mxu0 0.0
  %373 = vmatpush1.xpose.msra.mxu0 0.0
  %374 = vmatprep.mubr.f32.mxu0 0.0
  %375 = vmatmul.mubr.f32.gmra.mrb[0].mxu0 %v46
  %v376 = vpop.f32.mrb[0].mxu0
  %v377 = vadd.f32 0.0, %v376
  %v378 = vpop.f32.mrb[0].mxu0
  %379 = vmatprep.mubr.f32.mxu0 0.0
  %380 = vmatmul.mubr.f32.gmra.mrb[0].mxu0 %v49
  %v381 = vpop.f32.mrb[0].mxu0
  %v382 = vadd.f32 0.0, %v381
  %v383 = vpop.f32.mrb[0].mxu0
  %384 = vmatprep.mubr.f32.mxu0 0.0
  %385 = vmatmul.mubr.f32.gmra.mrb[0].mxu0 %v52
  %v386 = vpop.f32.mrb[0].mxu0
  %v387 = vadd.f32 0.0, %v386
  %v388 = vpop.f32.mrb[0].mxu0
  %389 = vmatprep.mubr.f32.mxu0 0.0
  %390 = vmatmul.mubr.f32.gmra.mrb[0].mxu0 %v55
  %v391 = vpop.f32.mrb[0].mxu0
  %v392 = vadd.f32 0.0, %v391
  %v393 = vpop.f32.mrb[0].mxu0
  %394 = vmatprep.mubr.f32.mxu0 0.0
  %395 = vmatmul.mubr.f32.gmra.mrb[0].mxu0 %v58
  %v396 = vpop.f32.mrb[0].mxu0
  %v397 = vadd.f32 0.0, %v396
  %v398 = vpop.f32.mrb[0].mxu0
  %399 = vmatprep.mubr.f32.mxu0 0.0
  %400 = vmatmul.mubr.f32.gmra.mrb[0].mxu0 %v61
  %v401 = vpop.f32.mrb[0].mxu0
  %v402 = vadd.f32 0.0, %v401
  %v403 = vpop.f32.mrb[0].mxu0
  %404 = vmatprep.mubr.f32.mxu0 0.0
  %405 = vmatmul.mubr.f32.gmra.mrb[0].mxu0 %v64
  %v406 = vpop.f32.mrb[0].mxu0
  %v407 = vadd.f32 0.0, %v406
  %v408 = vpop.f32.mrb[0].mxu0
  %409 = vmatprep.mubr.f32.mxu0 0.0
  %410 = vmatmul.mubr.f32.gmra.mrb[0].mxu0 %v67
  %v411 = vpop.f32.mrb[0].mxu0
  %v412 = vadd.f32 0.0, %v411
  %v413 = vpop.f32.mrb[0].mxu0
  %414 = vmatprep.mubr.f32.mxu0 0.0
  %415 = vmatmul.mubr.f32.gmra.mrb[0].mxu0 %v70
  %v416 = vpop.f32.mrb[0].mxu0
  %v417 = vadd.f32 0.0, %v416
  %v418 = vpop.f32.mrb[0].mxu0
  %419 = vmatprep.mubr.f32.mxu0 0.0
  %420 = vmatmul.mubr.f32.gmra.mrb[0].mxu0 %v73
  %v421 = vpop.f32.mrb[0].mxu0
  %v422 = vadd.f32 0.0, %v421
  %v423 = vpop.f32.mrb[0].mxu0
  %424 = vmatprep.mubr.f32.mxu0 0.0
  %425 = vmatmul.mubr.f32.gmra.mrb[0].mxu0 %v76
  %v426 = vpop.f32.mrb[0].mxu0
  %v427 = vadd.f32 0.0, %v426
  %v428 = vpop.f32.mrb[0].mxu0
  %429 = vmatprep.mubr.f32.mxu0 0.0
  %430 = vmatmul.mubr.f32.gmra.mrb[0].mxu0 %v79
  %v431 = vpop.f32.mrb[0].mxu0
  %v432 = vadd.f32 0.0, %v431
  %v433 = vpop.f32.mrb[0].mxu0
  %434 = vmatprep.mubr.f32.mxu0 0.0
  %435 = vmatmul.mubr.f32.gmra.mrb[0].mxu0 %v82
  %v436 = vpop.f32.mrb[0].mxu0
  %v437 = vadd.f32 0.0, %v436
  %v438 = vpop.f32.mrb[0].mxu0
  %439 = vmatprep.mubr.f32.mxu0 0.0
  %440 = vmatmul.mubr.f32.gmra.mrb[0].mxu0 %v85
  %v441 = vpop.f32.mrb[0].mxu0
  %v442 = vadd.f32 0.0, %v441
  %v443 = vpop.f32.mrb[0].mxu0
  %444 = vmatprep.mubr.f32.mxu0 0.0
  %445 = vmatmul.mubr.f32.gmra.mrb[0].mxu0 %v88
  %v446 = vpop.f32.mrb[0].mxu0
  %v447 = vadd.f32 0.0, %v446
  %v448 = vpop.f32.mrb[0].mxu0
  %449 = vmatprep.mubr.f32.mxu0 0.0
  %450 = vmatmul.mubr.f32.gmra.mrb[0].mxu0 %v91
  %v451 = vpop.f32.mrb[0].mxu0
  %v452 = vadd.f32 0.0, %v451
  %v453 = vpop.f32.mrb[0].mxu0
  %454 = vdwg.mxu0
  %455 = vst.msk [vmem:[%s5] sm:$0xff] %vm44, %v377
  %456 = vst.msk [vmem:[%s5 + $0x8] sm:$0xff] %vm44, %v382
  %457 = vst.msk [vmem:[%s5 + $0x10] sm:$0xff] %vm44, %v387
  %458 = vst.msk [vmem:[%s5 + $0x18] sm:$0xff] %vm44, %v392
  %459 = vst.msk [vmem:[%s5 + $0x20] sm:$0xff] %vm44, %v397
  %460 = vst.msk [vmem:[%s5 + $0x28] sm:$0xff] %vm44, %v402
  %461 = vst.msk [vmem:[%s5 + $0x30] sm:$0xff] %vm44, %v407
  %462 = vst.msk [vmem:[%s5 + $0x38] sm:$0xff] %vm44, %v412
  %463 = vst.msk [vmem:[%s5 + $0x40] sm:$0xff] %vm44, %v417
  %464 = vst.msk [vmem:[%s5 + $0x48] sm:$0xff] %vm44, %v422
  %465 = vst.msk [vmem:[%s5 + $0x50] sm:$0xff] %vm44, %v427
  %466 = vst.msk [vmem:[%s5 + $0x58] sm:$0xff] %vm44, %v432
  %467 = vst.msk [vmem:[%s5 + $0x60] sm:$0xff] %vm44, %v437
  %468 = vst.msk [vmem:[%s5 + $0x68] sm:$0xff] %vm44, %v442
  %469 = vst.msk [vmem:[%s5 + $0x70] sm:$0xff] %vm44, %v447
  %470 = vst.msk [vmem:[%s5 + $0x78] sm:$0xff] %vm44, %v452
  %v471 = vld [vmem:[%s3] sm:$0xff]
  %v472 = vld [vmem:[%s3 + $0x8] sm:$0xff]
  %v473 = vld [vmem:[%s3 + $0x10] sm:$0xff]
  %v474 = vld [vmem:[%s3 + $0x18] sm:$0xff]
  %v475 = vld [vmem:[%s3 + $0x20] sm:$0xff]
  %v476 = vld [vmem:[%s3 + $0x28] sm:$0xff]
  %v477 = vld [vmem:[%s3 + $0x30] sm:$0xff]
  %v478 = vld [vmem:[%s3 + $0x38] sm:$0xff]
  %v480 = vsel %vm44, %v471, 0
  %v483 = vsel %vm44, %v472, 0
  %v486 = vsel %vm44, %v473, 0
  %v489 = vsel %vm44, %v474, 0
  %v492 = vsel %vm44, %v475, 0
  %v495 = vsel %vm44, %v476, 0
  %v498 = vsel %vm44, %v477, 0
  %v501 = vsel %vm44, %v478, 0
  %503 = vmatprep.subr.mxu0 0.0
  %504 = vmatpush1.xpose.msra.mxu0 %v480
  %505 = vmatprep.subr.mxu0 0.0
  %506 = vmatpush1.xpose.msra.mxu0 %v483
  %507 = vmatprep.subr.mxu0 0.0
  %508 = vmatpush1.xpose.msra.mxu0 %v486
  %509 = vmatprep.subr.mxu0 0.0
  %510 = vmatpush1.xpose.msra.mxu0 %v489
  %511 = vmatprep.subr.mxu0 0.0
  %512 = vmatpush1.xpose.msra.mxu0 %v492
  %513 = vmatprep.subr.mxu0 0.0
  %514 = vmatpush1.xpose.msra.mxu0 %v495
  %515 = vmatprep.subr.mxu0 0.0
  %516 = vmatpush1.xpose.msra.mxu0 %v498
  %517 = vmatprep.subr.mxu0 0.0
  %518 = vmatpush1.xpose.msra.mxu0 %v501
  %519 = vmatprep.subr.mxu0 0.0
  %520 = vmatpush1.xpose.msra.mxu0 0.0
  %521 = vmatprep.subr.mxu0 0.0
  %522 = vmatpush1.xpose.msra.mxu0 0.0
  %523 = vmatprep.subr.mxu0 0.0
  %524 = vmatpush1.xpose.msra.mxu0 0.0
  %525 = vmatprep.subr.mxu0 0.0
  %526 = vmatpush1.xpose.msra.mxu0 0.0
  %527 = vmatprep.subr.mxu0 0.0
  %528 = vmatpush1.xpose.msra.mxu0 0.0
  %529 = vmatprep.subr.mxu0 0.0
  %530 = vmatpush1.xpose.msra.mxu0 0.0
  %531 = vmatprep.subr.mxu0 0.0
  %532 = vmatpush1.xpose.msra.mxu0 0.0
  %533 = vmatprep.subr.mxu0 0.0
  %534 = vmatpush1.xpose.msra.mxu0 0.0
  %535 = vmatprep.subr.mxu0 0.0
  %536 = vmatpush1.xpose.msra.mxu0 0.0
  %537 = vmatprep.subr.mxu0 0.0
  %538 = vmatpush1.xpose.msra.mxu0 0.0
  %539 = vmatprep.subr.mxu0 0.0
  %540 = vmatpush1.xpose.msra.mxu0 0.0
  %541 = vmatprep.subr.mxu0 0.0
  %542 = vmatpush1.xpose.msra.mxu0 0.0
  %543 = vmatprep.subr.mxu0 0.0
  %544 = vmatpush1.xpose.msra.mxu0 0.0
  %545 = vmatprep.subr.mxu0 0.0
  %546 = vmatpush1.xpose.msra.mxu0 0.0
  %547 = vmatprep.subr.mxu0 0.0
  %548 = vmatpush1.xpose.msra.mxu0 0.0
  %549 = vmatprep.subr.mxu0 0.0
  %550 = vmatpush1.xpose.msra.mxu0 0.0
  %551 = vmatprep.subr.mxu0 0.0
  %552 = vmatpush1.xpose.msra.mxu0 0.0
  %553 = vmatprep.subr.mxu0 0.0
  %554 = vmatpush1.xpose.msra.mxu0 0.0
  %555 = vmatprep.subr.mxu0 0.0
  %556 = vmatpush1.xpose.msra.mxu0 0.0
  %557 = vmatprep.subr.mxu0 0.0
  %558 = vmatpush1.xpose.msra.mxu0 0.0
  %559 = vmatprep.subr.mxu0 0.0
  %560 = vmatpush1.xpose.msra.mxu0 0.0
  %561 = vmatprep.subr.mxu0 0.0
  %562 = vmatpush1.xpose.msra.mxu0 0.0
  %563 = vmatprep.subr.mxu0 0.0
  %564 = vmatpush1.xpose.msra.mxu0 0.0
  %565 = vmatprep.subr.mxu0 0.0
  %566 = vmatpush1.xpose.msra.mxu0 0.0
  %567 = vmatprep.mubr.f32.mxu0 0.0
  %568 = vmatmul.mubr.f32.gmra.mrb[0].mxu0 %v46
  %v569 = vpop.f32.mrb[0].mxu0
  %v570 = vadd.f32 0.0, %v569
  %v571 = vpop.f32.mrb[0].mxu0
  %572 = vmatprep.mubr.f32.mxu0 0.0
  %573 = vmatmul.mubr.f32.gmra.mrb[0].mxu0 %v49
  %v574 = vpop.f32.mrb[0].mxu0
  %v575 = vadd.f32 0.0, %v574
  %v576 = vpop.f32.mrb[0].mxu0
  %577 = vmatprep.mubr.f32.mxu0 0.0
  %578 = vmatmul.mubr.f32.gmra.mrb[0].mxu0 %v52
  %v579 = vpop.f32.mrb[0].mxu0
  %v580 = vadd.f32 0.0, %v579
  %v581 = vpop.f32.mrb[0].mxu0
  %582 = vmatprep.mubr.f32.mxu0 0.0
  %583 = vmatmul.mubr.f32.gmra.mrb[0].mxu0 %v55
  %v584 = vpop.f32.mrb[0].mxu0
  %v585 = vadd.f32 0.0, %v584
  %v586 = vpop.f32.mrb[0].mxu0
  %587 = vmatprep.mubr.f32.mxu0 0.0
  %588 = vmatmul.mubr.f32.gmra.mrb[0].mxu0 %v58
  %v589 = vpop.f32.mrb[0].mxu0
  %v590 = vadd.f32 0.0, %v589
  %v591 = vpop.f32.mrb[0].mxu0
  %592 = vmatprep.mubr.f32.mxu0 0.0
  %593 = vmatmul.mubr.f32.gmra.mrb[0].mxu0 %v61
  %v594 = vpop.f32.mrb[0].mxu0
  %v595 = vadd.f32 0.0, %v594
  %v596 = vpop.f32.mrb[0].mxu0
  %597 = vmatprep.mubr.f32.mxu0 0.0
  %598 = vmatmul.mubr.f32.gmra.mrb[0].mxu0 %v64
  %v599 = vpop.f32.mrb[0].mxu0
  %v600 = vadd.f32 0.0, %v599
  %v601 = vpop.f32.mrb[0].mxu0
  %602 = vmatprep.mubr.f32.mxu0 0.0
  %603 = vmatmul.mubr.f32.gmra.mrb[0].mxu0 %v67
  %v604 = vpop.f32.mrb[0].mxu0
  %v605 = vadd.f32 0.0, %v604
  %v606 = vpop.f32.mrb[0].mxu0
  %607 = vmatprep.mubr.f32.mxu0 0.0
  %608 = vmatmul.mubr.f32.gmra.mrb[0].mxu0 %v70
  %v609 = vpop.f32.mrb[0].mxu0
  %v610 = vadd.f32 0.0, %v609
  %v611 = vpop.f32.mrb[0].mxu0
  %612 = vmatprep.mubr.f32.mxu0 0.0
  %613 = vmatmul.mubr.f32.gmra.mrb[0].mxu0 %v73
  %v614 = vpop.f32.mrb[0].mxu0
  %v615 = vadd.f32 0.0, %v614
  %v616 = vpop.f32.mrb[0].mxu0
  %617 = vmatprep.mubr.f32.mxu0 0.0
  %618 = vmatmul.mubr.f32.gmra.mrb[0].mxu0 %v76
  %v619 = vpop.f32.mrb[0].mxu0
  %v620 = vadd.f32 0.0, %v619
  %v621 = vpop.f32.mrb[0].mxu0
  %622 = vmatprep.mubr.f32.mxu0 0.0
  %623 = vmatmul.mubr.f32.gmra.mrb[0].mxu0 %v79
  %v624 = vpop.f32.mrb[0].mxu0
  %v625 = vadd.f32 0.0, %v624
  %v626 = vpop.f32.mrb[0].mxu0
  %627 = vmatprep.mubr.f32.mxu0 0.0
  %628 = vmatmul.mubr.f32.gmra.mrb[0].mxu0 %v82
  %v629 = vpop.f32.mrb[0].mxu0
  %v630 = vadd.f32 0.0, %v629
  %v631 = vpop.f32.mrb[0].mxu0
  %632 = vmatprep.mubr.f32.mxu0 0.0
  %633 = vmatmul.mubr.f32.gmra.mrb[0].mxu0 %v85
  %v634 = vpop.f32.mrb[0].mxu0
  %v635 = vadd.f32 0.0, %v634
  %v636 = vpop.f32.mrb[0].mxu0
  %637 = vmatprep.mubr.f32.mxu0 0.0
  %638 = vmatmul.mubr.f32.gmra.mrb[0].mxu0 %v88
  %v639 = vpop.f32.mrb[0].mxu0
  %v640 = vadd.f32 0.0, %v639
  %v641 = vpop.f32.mrb[0].mxu0
  %642 = vmatprep.mubr.f32.mxu0 0.0
  %643 = vmatmul.mubr.f32.gmra.mrb[0].mxu0 %v91
  %v644 = vpop.f32.mrb[0].mxu0
  %v645 = vadd.f32 0.0, %v644
  %v646 = vpop.f32.mrb[0].mxu0
  %647 = vdwg.mxu0
  %648 = vst.msk [vmem:[%s6] sm:$0xff] %vm44, %v570
  %649 = vst.msk [vmem:[%s6 + $0x8] sm:$0xff] %vm44, %v575
  %650 = vst.msk [vmem:[%s6 + $0x10] sm:$0xff] %vm44, %v580
  %651 = vst.msk [vmem:[%s6 + $0x18] sm:$0xff] %vm44, %v585
  %652 = vst.msk [vmem:[%s6 + $0x20] sm:$0xff] %vm44, %v590
  %653 = vst.msk [vmem:[%s6 + $0x28] sm:$0xff] %vm44, %v595
  %654 = vst.msk [vmem:[%s6 + $0x30] sm:$0xff] %vm44, %v600
  %655 = vst.msk [vmem:[%s6 + $0x38] sm:$0xff] %vm44, %v605
  %656 = vst.msk [vmem:[%s6 + $0x40] sm:$0xff] %vm44, %v610
  %657 = vst.msk [vmem:[%s6 + $0x48] sm:$0xff] %vm44, %v615
  %658 = vst.msk [vmem:[%s6 + $0x50] sm:$0xff] %vm44, %v620
  %659 = vst.msk [vmem:[%s6 + $0x58] sm:$0xff] %vm44, %v625
  %660 = vst.msk [vmem:[%s6 + $0x60] sm:$0xff] %vm44, %v630
  %661 = vst.msk [vmem:[%s6 + $0x68] sm:$0xff] %vm44, %v635
  %662 = vst.msk [vmem:[%s6 + $0x70] sm:$0xff] %vm44, %v640
  %663 = vst.msk [vmem:[%s6 + $0x78] sm:$0xff] %vm44, %v645
  // Predicated region
  $region18: #{tpu_custom_call.1} parent=0 // pred_check
    _
  $region19: #{tpu_custom_call.1} parent=0 // pred_check_branch
    %665 = sbr.rel (0) target = $region21
  $region20: #{tpu_custom_call.1} parent=0 // pred_region
    _
  $region21: #{tpu_custom_call.1} parent=0 // pred_fallthru
    _
  // Predicated region
  $region22: #{tpu_custom_call.1} parent=0 // pred_check
    _
  $region23: #{tpu_custom_call.1} parent=0 // pred_check_branch
    %667 = sbr.rel (0) target = $region25
  $region24: #{tpu_custom_call.1} parent=0 // pred_region
    _
  $region25: #{tpu_custom_call.1} parent=0 // pred_fallthru
    _
  // Predicated region
  $region26: #{tpu_custom_call.1} parent=0 // pred_check
    _
  $region27: #{tpu_custom_call.1} parent=0 // pred_check_branch
    %669 = sbr.rel (0) target = $region29
  $region28: #{tpu_custom_call.1} parent=0 // pred_region
    _
  $region29: #{tpu_custom_call.1} parent=0 // pred_fallthru
    _
  // Predicated region
  $region30: #{tpu_custom_call.1} parent=0 // pred_check
    _
  $region31: #{tpu_custom_call.1} parent=0 // pred_check_branch
    %671 = sbr.rel (0) target = $region33
  $region32: #{tpu_custom_call.1} parent=0 // pred_region
    _
  $region33: #{tpu_custom_call.1} parent=0 // pred_fallthru
    _
  // Predicated region
  $region34: #{tpu_custom_call.1} parent=0 // pred_check
    _
  $region35: #{tpu_custom_call.1} parent=0 // pred_check_branch
    %673 = sbr.rel (0) target = $region37
  $region36: #{tpu_custom_call.1} parent=0 // pred_region
    _
  $region37: #{tpu_custom_call.1} parent=0 // pred_fallthru
    _
  // Predicated region
  $region38: #{tpu_custom_call.1} parent=0 // pred_check
    _
  $region39: #{tpu_custom_call.1} parent=0 // pred_check_branch
    %675 = sbr.rel (0) target = $region41
  $region40: #{tpu_custom_call.1} parent=0 // pred_region
    _
  $region41: #{tpu_custom_call.1} parent=0 // pred_fallthru
    _

</llo_original>
